<compile_context>
chip_gen: v7x
topology: tpu7x:2x2x1
jax: 0.10.0
libtpu: 0.0.40
codegen_flags: <defaults>
</compile_context>

<pallas_src>
import jax
import jax.numpy as jnp
from jax import lax
from jax.experimental import pallas as pl
from jax.experimental.pallas import tpu as pltpu


def _chn_attention_kernel(x_ref, w_ref, b_ref, o_ref):
    # x_ref: (TB, C, L) in x.dtype; w_ref: (O, C) in x.dtype;
    # b_ref: (O, L) f32; o_ref: (TB, O, L) in x.dtype.
    w = w_ref[...]
    bias = b_ref[...]

    # TB is small & static (capped in the wrapper) -> short unrolled loop of clean
    # 2-D matmuls; no batch-1 3-D dot_generals, no batched layouts.
    for b_idx in range(x_ref.shape[0]):
        x_b = x_ref[b_idx]                                   # (C, L), native dtype

        # logits = x_b @ x_b^T : contract the lane axis of both operands
        # (standard q.k^T pattern; no materialized transpose of the tile).
        logits = lax.dot_general(
            x_b, x_b,
            dimension_numbers=(((1,), (1,)), ((), ())),
            preferred_element_type=jnp.float32)              # (C, C) f32

        # Numerically-stable softmax over the last axis.
        m = jnp.max(logits, axis=-1, keepdims=True)
        e = jnp.exp(logits - m)
        denom = jnp.sum(e, axis=-1, keepdims=True)
        weights = (e * pl.reciprocal(denom, approx=True))    # EUP vrcp slot
        weights = weights.astype(x_b.dtype)                  # MXU-native dtype

        # attn = weights @ x_b   (f32 accumulation on the MXU)
        attn = jnp.dot(weights, x_b,
                       preferred_element_type=jnp.float32)   # (C, L) f32

        # 1x1 Conv1d == pointwise channel mixing: W @ attn + bias.
        out_b = jnp.dot(w, attn.astype(w.dtype),
                        preferred_element_type=jnp.float32) + bias
        o_ref[b_idx] = out_b.astype(o_ref.dtype)


def s_chn_attention_1d(x, weight, bias):
    """x: (N, C, L); weight: (out_chn, C, 1); bias: (out_chn,) -> (N, out_chn, L)."""
    N, C, L = x.shape
    out_chn = weight.shape[0]
    itemsize = jnp.dtype(x.dtype).itemsize

    # --- batch tile from a VMEM budget (future-proofs v7x's 64 MiB physical VMEM) ---
    # Per-example footprint: double-buffered x and out blocks + f32 intermediates
    # (logits, attn, conv accumulator) held live inside the unrolled body.
    per_example = (2 * C * L * itemsize            # x block (double buffered)
                   + C * C * 4                     # f32 logits
                   + 2 * C * L * 4                 # f32 attn + conv accumulator
                   + 2 * out_chn * L * itemsize)   # out block (double buffered)
    vmem_budget = 8 * 1024 * 1024                  # well under the 32 MiB scoped limit
    tb = max(1, min(N, vmem_budget // max(per_example, 1)))
    # Cap the static unroll so compile time / vreg pressure stay sane; the ~0.35 us
    # per-step cost is fully amortized over 64 examples anyway.
    tb = min(tb, 64)
    num_steps = pl.cdiv(N, tb)
    # At the tiny shapes of this module num_steps == 1: whole batch in one grid step
    # (no serial step overhead on 1-TC v5e/v6e).  A 2-way megacore split on v7x was
    # reviewed as not worth the per-core kick-off for <1 us of body work.

    # Conv1d(k=1) weight as a 2-D channel-mixing matrix in the input's dtype
    # (keeps the MXU in its native precision; accumulation is f32 in-kernel).
    w2d = weight.reshape(out_chn, C).astype(x.dtype)
    # Bias pre-broadcast to (out_chn, L) in f32: one constant fetch, plain
    # elementwise add onto the f32 accumulator, no lane-1 operand in-kernel.
    b2d = jnp.broadcast_to(bias.astype(jnp.float32)[:, None], (out_chn, L))

    out = pl.pallas_call(
        _chn_attention_kernel,
        out_shape=jax.ShapeDtypeStruct((N, out_chn, L), x.dtype),
        grid_spec=pltpu.PrefetchScalarGridSpec(
            num_scalar_prefetch=0,
            grid=(num_steps,),
            in_specs=[
                pl.BlockSpec((tb, C, L), lambda s: (s, 0, 0)),
                pl.BlockSpec((out_chn, C), lambda s: (0, 0)),
                pl.BlockSpec((out_chn, L), lambda s: (0, 0)),
            ],
            out_specs=pl.BlockSpec((tb, out_chn, L), lambda s: (s, 0, 0)),
        ),
        compiler_params=pltpu.CompilerParams(
            dimension_semantics=("parallel",),
            vmem_limit_bytes=32 * 1024 * 1024,
        ),
    )(x, w2d, b2d)
    return out


def _reference(x, weight, bias):
    # Pure-JAX reference of the PyTorch forward, for correctness check.
    logits = jnp.einsum("ncl,nkl->nck", x, x)
    w = jax.nn.softmax(logits, axis=-1)
    attn = jnp.einsum("nck,nkl->ncl", w, x)
    w2d = weight.reshape(weight.shape[0], weight.shape[1])
    return jnp.einsum("oc,ncl->nol", w2d, attn) + bias[None, :, None]


if __name__ == "__main__":
    # Small shapes consistent with the module: batch=2, in_chn=4, length=16, out_chn=8
    N, C, L, OUT = 2, 4, 16, 8

    key = jax.random.PRNGKey(0)
    kx, kw, kb = jax.random.split(key, 3)
    x = jax.random.normal(kx, (N, C, L), dtype=jnp.float32)
    # Deterministic Conv1d(k=1) parameters: weight (out_chn, in_chn, 1), bias (out_chn,)
    weight = jax.random.normal(kw, (OUT, C, 1), dtype=jnp.float32) * 0.1
    bias = jax.random.normal(kb, (OUT,), dtype=jnp.float32) * 0.1

    out = jax.block_until_ready(s_chn_attention_1d(x, weight, bias))
    ref = _reference(x, weight, bias)

    assert out.shape == (N, OUT, L)
    # approx=True reciprocal in the softmax denominator changes a few ulps; 1e-3
    # is still tight for f32 while leaving margin for the EUP approximation.
    assert jnp.allclose(out, ref, atol=1e-3, rtol=1e-3), "mismatch vs reference"

    print("KERNEL_OK")
</pallas_src>

<mosaic_0001>
module attributes {stable_mosaic.version = 11 : i64} {
  func.func @_chn_attention_kernel(%arg0: i32, %arg1: memref<2x4x16xf32, #tpu.memory_space<vmem>>, %arg2: memref<8x4xf32, #tpu.memory_space<vmem>>, %arg3: memref<8x16xf32, #tpu.memory_space<vmem>>, %arg4: memref<2x8x16xf32, #tpu.memory_space<vmem>>) attributes {dimension_semantics = [#tpu.dimension_semantics<parallel>], iteration_bounds = array<i64: 1>, scalar_prefetch = 0 : i64, scratch_operands = 0 : i64, tpu.core_type = #tpu.core_type<tc>, window_params = [{transform_indices = @transform_0, window_bounds = array<i64: 2, 4, 16>}, {pipeline_mode = #tpu.pipeline_mode<synchronous>, transform_indices = @transform_1, window_bounds = array<i64: 8, 4>}, {pipeline_mode = #tpu.pipeline_mode<synchronous>, transform_indices = @transform_2, window_bounds = array<i64: 8, 16>}, {transform_indices = @transform_3, window_bounds = array<i64: 2, 8, 16>}]} {
    %c0 = arith.constant 0 : index
    %c0_0 = arith.constant 0 : index
    %0 = vector.load %arg2[%c0, %c0_0] : memref<8x4xf32, #tpu.memory_space<vmem>>, vector<8x4xf32>
    %c0_1 = arith.constant 0 : index
    %c0_2 = arith.constant 0 : index
    %1 = vector.load %arg3[%c0_1, %c0_2] : memref<8x16xf32, #tpu.memory_space<vmem>>, vector<8x16xf32>
    %c0_3 = arith.constant 0 : index
    %c0_4 = arith.constant 0 : index
    %c0_5 = arith.constant 0 : index
    %2 = vector.load %arg1[%c0_3, %c0_4, %c0_5] : memref<2x4x16xf32, #tpu.memory_space<vmem>>, vector<1x4x16xf32>
    %3 = vector.shape_cast %2 : vector<1x4x16xf32> to vector<4x16xf32>
    %cst = arith.constant dense<0.000000e+00> : vector<4x4xf32>
    %4 = tpu.matmul %3, %3, %cst {dimension_numbers = #tpu.dot_dimension_numbers<[1], [1], [0], [0], [0, 0, 1, 0], [], []>} : vector<4x16xf32>, vector<4x16xf32>, vector<4x4xf32> -> vector<4x4xf32>
    %cst_6 = arith.constant dense<0xFF800000> : vector<4xf32>
    %5 = vector.multi_reduction <maximumf>, %4, %cst_6 [1] : vector<4x4xf32> to vector<4xf32>
    %6 = vector.shape_cast %5 : vector<4xf32> to vector<4x1xf32>
    %7 = vector.broadcast %6 : vector<4x1xf32> to vector<4x4xf32>
    %8 = arith.subf %4, %7 : vector<4x4xf32>
    %9 = math.exp %8 : vector<4x4xf32>
    %cst_7 = arith.constant dense<0.000000e+00> : vector<4xf32>
    %10 = vector.multi_reduction <add>, %9, %cst_7 [1] : vector<4x4xf32> to vector<4xf32>
    %11 = vector.shape_cast %10 : vector<4xf32> to vector<4x1xf32>
    %12 = tpu.reciprocal %11 {approx = true} : vector<4x1xf32> -> vector<4x1xf32>
    %13 = vector.broadcast %12 : vector<4x1xf32> to vector<4x4xf32>
    %14 = arith.mulf %9, %13 : vector<4x4xf32>
    %cst_8 = arith.constant dense<0.000000e+00> : vector<4x16xf32>
    %15 = tpu.matmul %14, %3, %cst_8 {dimension_numbers = #tpu.dot_dimension_numbers<[1], [0], [0], [1], [0, 0, 1, 1], [], []>} : vector<4x4xf32>, vector<4x16xf32>, vector<4x16xf32> -> vector<4x16xf32>
    %cst_9 = arith.constant dense<0.000000e+00> : vector<8x16xf32>
    %16 = tpu.matmul %0, %15, %cst_9 {dimension_numbers = #tpu.dot_dimension_numbers<[1], [0], [0], [1], [0, 0, 1, 1], [], []>} : vector<8x4xf32>, vector<4x16xf32>, vector<8x16xf32> -> vector<8x16xf32>
    %17 = arith.addf %16, %1 : vector<8x16xf32>
    %c0_10 = arith.constant 0 : index
    %c0_11 = arith.constant 0 : index
    %c0_12 = arith.constant 0 : index
    %18 = vector.load %arg4[%c0_10, %c0_11, %c0_12] : memref<2x8x16xf32, #tpu.memory_space<vmem>>, vector<1x8x16xf32>
    %19 = vector.shape_cast %18 : vector<1x8x16xf32> to vector<8x16xf32>
    %20 = vector.shape_cast %17 : vector<8x16xf32> to vector<1x8x16xf32>
    tpu.vector_store %arg4[%c0_10, %c0_11, %c0_12], %20 {strides = array<i32>} : memref<2x8x16xf32, #tpu.memory_space<vmem>>, vector<1x8x16xf32>,
    %c1 = arith.constant 1 : index
    %c0_13 = arith.constant 0 : index
    %c0_14 = arith.constant 0 : index
    %21 = vector.load %arg1[%c1, %c0_13, %c0_14] : memref<2x4x16xf32, #tpu.memory_space<vmem>>, vector<1x4x16xf32>
    %22 = vector.shape_cast %21 : vector<1x4x16xf32> to vector<4x16xf32>
    %cst_15 = arith.constant dense<0.000000e+00> : vector<4x4xf32>
    %23 = tpu.matmul %22, %22, %cst_15 {dimension_numbers = #tpu.dot_dimension_numbers<[1], [1], [0], [0], [0, 0, 1, 0], [], []>} : vector<4x16xf32>, vector<4x16xf32>, vector<4x4xf32> -> vector<4x4xf32>
    %cst_16 = arith.constant dense<0xFF800000> : vector<4xf32>
    %24 = vector.multi_reduction <maximumf>, %23, %cst_16 [1] : vector<4x4xf32> to vector<4xf32>
    %25 = vector.shape_cast %24 : vector<4xf32> to vector<4x1xf32>
    %26 = vector.broadcast %25 : vector<4x1xf32> to vector<4x4xf32>
    %27 = arith.subf %23, %26 : vector<4x4xf32>
    %28 = math.exp %27 : vector<4x4xf32>
    %cst_17 = arith.constant dense<0.000000e+00> : vector<4xf32>
    %29 = vector.multi_reduction <add>, %28, %cst_17 [1] : vector<4x4xf32> to vector<4xf32>
    %30 = vector.shape_cast %29 : vector<4xf32> to vector<4x1xf32>
    %31 = tpu.reciprocal %30 {approx = true} : vector<4x1xf32> -> vector<4x1xf32>
    %32 = vector.broadcast %31 : vector<4x1xf32> to vector<4x4xf32>
    %33 = arith.mulf %28, %32 : vector<4x4xf32>
    %cst_18 = arith.constant dense<0.000000e+00> : vector<4x16xf32>
    %34 = tpu.matmul %33, %22, %cst_18 {dimension_numbers = #tpu.dot_dimension_numbers<[1], [0], [0], [1], [0, 0, 1, 1], [], []>} : vector<4x4xf32>, vector<4x16xf32>, vector<4x16xf32> -> vector<4x16xf32>
    %cst_19 = arith.constant dense<0.000000e+00> : vector<8x16xf32>
    %35 = tpu.matmul %0, %34, %cst_19 {dimension_numbers = #tpu.dot_dimension_numbers<[1], [0], [0], [1], [0, 0, 1, 1], [], []>} : vector<8x4xf32>, vector<4x16xf32>, vector<8x16xf32> -> vector<8x16xf32>
    %36 = arith.addf %35, %1 : vector<8x16xf32>
    %c1_20 = arith.constant 1 : index
    %c0_21 = arith.constant 0 : index
    %c0_22 = arith.constant 0 : index
    %37 = vector.load %arg4[%c1_20, %c0_21, %c0_22] : memref<2x8x16xf32, #tpu.memory_space<vmem>>, vector<1x8x16xf32>
    %38 = vector.shape_cast %37 : vector<1x8x16xf32> to vector<8x16xf32>
    %39 = vector.shape_cast %36 : vector<8x16xf32> to vector<1x8x16xf32>
    tpu.vector_store %arg4[%c1_20, %c0_21, %c0_22], %39 {strides = array<i32>} : memref<2x8x16xf32, #tpu.memory_space<vmem>>, vector<1x8x16xf32>,
    return
  }
  func.func @transform_0(%arg0: i32) -> (i32, i32, i32) {
    %c0_i32 = arith.constant 0 : i32
    %c0_i32_0 = arith.constant 0 : i32
    %c0_i32_1 = arith.constant 0 : i32
    return %arg0, %c0_i32, %c0_i32_0 : i32, i32, i32
  }
  func.func @transform_1(%arg0: i32) -> (i32, i32) {
    %c0_i32 = arith.constant 0 : i32
    %c0_i32_0 = arith.constant 0 : i32
    %c0_i32_1 = arith.constant 0 : i32
    return %c0_i32, %c0_i32_0 : i32, i32
  }
  func.func @transform_2(%arg0: i32) -> (i32, i32) {
    %c0_i32 = arith.constant 0 : i32
    %c0_i32_0 = arith.constant 0 : i32
    %c0_i32_1 = arith.constant 0 : i32
    return %c0_i32, %c0_i32_0 : i32, i32
  }
  func.func @transform_3(%arg0: i32) -> (i32, i32, i32) {
    %c0_i32 = arith.constant 0 : i32
    %c0_i32_0 = arith.constant 0 : i32
    %c0_i32_1 = arith.constant 0 : i32
    return %arg0, %c0_i32, %c0_i32_0 : i32, i32, i32
  }
}

</mosaic_0001>

<llo_original>
// kernel: tpu_custom_call.1
$region0: #{tpu_custom_call.1}
  #allocation0 [shape = 'u32[]', space=smem, size = 0x4, offset = 0x4, fixed_abs, tag = 'smem constant byte address 0x4 - core index']
  #allocation1 [shape = 'u32[144,128]{1,0:T(1,128)}', space=vmem, size = 0x12000, scoped, tag = 'internal scratch']
  %s0 = inlined_call_operand.vmem [shape: f32[2,4,16], index: 0, kind: input, shape index: {}]
  %s1 = inlined_call_operand.vmem [shape: f32[8,4], index: 1, kind: input, shape index: {}]
  %s2 = inlined_call_operand.vmem [shape: f32[8,16], index: 2, kind: input, shape index: {}]
  %s3 = inlined_call_operand.hbm [shape: f32[2,8,16], index: 3, kind: output, shape index: {}]
  %s4 = sld [smem:[#allocation0]]
  $region22: #{tpu_custom_call.1} parent=0
    _
  %s6 = ssub.s32 1, %s4
  %s7 = scalar_select 0, %s6, %s4
  $region1: #{tpu_custom_call.1} parent=0
    #allocation2 [shape = 'u8[8192]{0}', space=vmem, size = 0x2000, scoped, tag = 'output window, operand 0, single buffered']
    #allocation3 [shape = 's32[1]{0}', space=sflag, size = 0x4, scoped, tag = 'scoped memory for tpu_custom_call.1']
    %8 = vsyncpa [#allocation3], 0
    // Predicated region
    $region2: #{tpu_custom_call.1} parent=1 // pred_check
      _
    $region3: #{tpu_custom_call.1} parent=1 // pred_check_branch
      %10 = sbr.rel (0) target = $region5
    $region4: #{tpu_custom_call.1} parent=1 // pred_region
      _
    $region5: #{tpu_custom_call.1} parent=1 // pred_fallthru
      _
    // Predicated region
    $region6: #{tpu_custom_call.1} parent=1 // pred_check
      _
    $region7: #{tpu_custom_call.1} parent=1 // pred_check_branch
      %12 = sbr.rel (0) target = $region9
    $region8: #{tpu_custom_call.1} parent=1 // pred_region
      _
    $region9: #{tpu_custom_call.1} parent=1 // pred_fallthru
      _
    // Predicated region
    $region10: #{tpu_custom_call.1} parent=1 // pred_check
      _
    $region11: #{tpu_custom_call.1} parent=1 // pred_check_branch
      %14 = sbr.rel (0) target = $region13
    $region12: #{tpu_custom_call.1} parent=1 // pred_region
      _
    $region13: #{tpu_custom_call.1} parent=1 // pred_fallthru
      _
    %v15 = vld [vmem:[%s1] sm:$0xff]
    %v16 = vld [vmem:[%s2] sm:$0xff]
    %v17 = vld [vmem:[%s0] sm:$0xf]
    %vm18 = vcmask 130048
    %v20 = vsel %vm18, %v17, 0
    %22 = vmatprep.subr.mxu0 0.0
    %23 = vmatpush1.xpose.msra.mxu0 %v20
    %24 = vmatprep.subr.mxu0 0.0
    %25 = vmatpush1.xpose.msra.mxu0 0.0
    %26 = vmatprep.subr.mxu0 0.0
    %27 = vmatpush1.xpose.msra.mxu0 0.0
    %28 = vmatprep.subr.mxu0 0.0
    %29 = vmatpush1.xpose.msra.mxu0 0.0
    %30 = vmatprep.subr.mxu0 0.0
    %31 = vmatpush1.xpose.msra.mxu0 0.0
    %32 = vmatprep.subr.mxu0 0.0
    %33 = vmatpush1.xpose.msra.mxu0 0.0
    %34 = vmatprep.subr.mxu0 0.0
    %35 = vmatpush1.xpose.msra.mxu0 0.0
    %36 = vmatprep.subr.mxu0 0.0
    %37 = vmatpush1.xpose.msra.mxu0 0.0
    %38 = vmatprep.subr.mxu0 0.0
    %39 = vmatpush1.xpose.msra.mxu0 0.0
    %40 = vmatprep.subr.mxu0 0.0
    %41 = vmatpush1.xpose.msra.mxu0 0.0
    %42 = vmatprep.subr.mxu0 0.0
    %43 = vmatpush1.xpose.msra.mxu0 0.0
    %44 = vmatprep.subr.mxu0 0.0
    %45 = vmatpush1.xpose.msra.mxu0 0.0
    %46 = vmatprep.subr.mxu0 0.0
    %47 = vmatpush1.xpose.msra.mxu0 0.0
    %48 = vmatprep.subr.mxu0 0.0
    %49 = vmatpush1.xpose.msra.mxu0 0.0
    %50 = vmatprep.subr.mxu0 0.0
    %51 = vmatpush1.xpose.msra.mxu0 0.0
    %52 = vmatprep.subr.mxu0 0.0
    %53 = vmatpush1.xpose.msra.mxu0 0.0
    %54 = vmatprep.subr.mxu0 0.0
    %55 = vmatpush1.xpose.msra.mxu0 0.0
    %56 = vmatprep.subr.mxu0 0.0
    %57 = vmatpush1.xpose.msra.mxu0 0.0
    %58 = vmatprep.subr.mxu0 0.0
    %59 = vmatpush1.xpose.msra.mxu0 0.0
    %60 = vmatprep.subr.mxu0 0.0
    %61 = vmatpush1.xpose.msra.mxu0 0.0
    %62 = vmatprep.subr.mxu0 0.0
    %63 = vmatpush1.xpose.msra.mxu0 0.0
    %64 = vmatprep.subr.mxu0 0.0
    %65 = vmatpush1.xpose.msra.mxu0 0.0
    %66 = vmatprep.subr.mxu0 0.0
    %67 = vmatpush1.xpose.msra.mxu0 0.0
    %68 = vmatprep.subr.mxu0 0.0
    %69 = vmatpush1.xpose.msra.mxu0 0.0
    %70 = vmatprep.subr.mxu0 0.0
    %71 = vmatpush1.xpose.msra.mxu0 0.0
    %72 = vmatprep.subr.mxu0 0.0
    %73 = vmatpush1.xpose.msra.mxu0 0.0
    %74 = vmatprep.subr.mxu0 0.0
    %75 = vmatpush1.xpose.msra.mxu0 0.0
    %76 = vmatprep.subr.mxu0 0.0
    %77 = vmatpush1.xpose.msra.mxu0 0.0
    %78 = vmatprep.subr.mxu0 0.0
    %79 = vmatpush1.xpose.msra.mxu0 0.0
    %80 = vmatprep.subr.mxu0 0.0
    %81 = vmatpush1.xpose.msra.mxu0 0.0
    %82 = vmatprep.subr.mxu0 0.0
    %83 = vmatpush1.xpose.msra.mxu0 0.0
    %84 = vmatprep.subr.mxu0 0.0
    %85 = vmatpush1.xpose.msra.mxu0 0.0
    %86 = vmatprep.mubr.f32.mxu0 0.0
    %87 = vmatmul.mubr.f32.gmra.mrb[0].mxu0 %v20
    %v88 = vpop.f32.mrb[0].mxu0
    %v89 = vadd.f32 0.0, %v88
    %v90 = vpop.f32.mrb[0].mxu0
    %91 = vdwg.mxu0
    %vm92 = vcmask 27648
    %v93 = vsel %vm92, %v89, -inf
    %94 = vmax.xlane.f32.xlu0 %v93
    %v95 = vpop.xlane.xlu0 %94
    %v96 = vsub.f32 %v89, %v95
    %v97 = vmul.f32 %v96, 1.442695
    %v98 = vpow.pop %v97
    %v99 = vsel %vm92, %v98, 0.0
    %100 = vadd.xlane.f32.xlu0 %v99
    %v101 = vpop.xlane.xlu0 %100
    %v102 = vrcp.pop %v101
    %v103 = vmul.f32 %v98, %v102
    %vm104 = vcmask 31744
    %v106 = vsel %vm104, %v103, 0
    %vm108 = vcmask 1043456
    %v109 = vsel %vm108, %v17, 0
    %111 = vmatprep.subr.mxu0 0.0
    %112 = vmatpush1.msra.mxu0 %v109
    %113 = vmatprep.subr.mxu0 0.0
    %114 = vmatpush1.msra.mxu0 0.0
    %115 = vmatprep.subr.mxu0 0.0
    %116 = vmatpush1.msra.mxu0 0.0
    %117 = vmatprep.subr.mxu0 0.0
    %118 = vmatpush1.msra.mxu0 0.0
    %119 = vmatprep.subr.mxu0 0.0
    %120 = vmatpush1.msra.mxu0 0.0
    %121 = vmatprep.subr.mxu0 0.0
    %122 = vmatpush1.msra.mxu0 0.0
    %123 = vmatprep.subr.mxu0 0.0
    %124 = vmatpush1.msra.mxu0 0.0
    %125 = vmatprep.subr.mxu0 0.0
    %126 = vmatpush1.msra.mxu0 0.0
    %127 = vmatprep.subr.mxu0 0.0
    %128 = vmatpush1.msra.mxu0 0.0
    %129 = vmatprep.subr.mxu0 0.0
    %130 = vmatpush1.msra.mxu0 0.0
    %131 = vmatprep.subr.mxu0 0.0
    %132 = vmatpush1.msra.mxu0 0.0
    %133 = vmatprep.subr.mxu0 0.0
    %134 = vmatpush1.msra.mxu0 0.0
    %135 = vmatprep.subr.mxu0 0.0
    %136 = vmatpush1.msra.mxu0 0.0
    %137 = vmatprep.subr.mxu0 0.0
    %138 = vmatpush1.msra.mxu0 0.0
    %139 = vmatprep.subr.mxu0 0.0
    %140 = vmatpush1.msra.mxu0 0.0
    %141 = vmatprep.subr.mxu0 0.0
    %142 = vmatpush1.msra.mxu0 0.0
    %143 = vmatprep.subr.mxu0 0.0
    %144 = vmatpush1.msra.mxu0 0.0
    %145 = vmatprep.subr.mxu0 0.0
    %146 = vmatpush1.msra.mxu0 0.0
    %147 = vmatprep.subr.mxu0 0.0
    %148 = vmatpush1.msra.mxu0 0.0
    %149 = vmatprep.subr.mxu0 0.0
    %150 = vmatpush1.msra.mxu0 0.0
    %151 = vmatprep.subr.mxu0 0.0
    %152 = vmatpush1.msra.mxu0 0.0
    %153 = vmatprep.subr.mxu0 0.0
    %154 = vmatpush1.msra.mxu0 0.0
    %155 = vmatprep.subr.mxu0 0.0
    %156 = vmatpush1.msra.mxu0 0.0
    %157 = vmatprep.subr.mxu0 0.0
    %158 = vmatpush1.msra.mxu0 0.0
    %159 = vmatprep.subr.mxu0 0.0
    %160 = vmatpush1.msra.mxu0 0.0
    %161 = vmatprep.subr.mxu0 0.0
    %162 = vmatpush1.msra.mxu0 0.0
    %163 = vmatprep.subr.mxu0 0.0
    %164 = vmatpush1.msra.mxu0 0.0
    %165 = vmatprep.subr.mxu0 0.0
    %166 = vmatpush1.msra.mxu0 0.0
    %167 = vmatprep.subr.mxu0 0.0
    %168 = vmatpush1.msra.mxu0 0.0
    %169 = vmatprep.subr.mxu0 0.0
    %170 = vmatpush1.msra.mxu0 0.0
    %171 = vmatprep.subr.mxu0 0.0
    %172 = vmatpush1.msra.mxu0 0.0
    %173 = vmatprep.subr.mxu0 0.0
    %174 = vmatpush1.msra.mxu0 0.0
    %175 = vmatprep.mubr.f32.mxu0 0.0
    %176 = vmatmul.mubr.f32.gmra.mrb[0].mxu0 %v106
    %v177 = vpop.f32.mrb[0].mxu0
    %v178 = vadd.f32 0.0, %v177
    %v179 = vpop.f32.mrb[0].mxu0
    %180 = vdwg.mxu0
    %v182 = vsel %vm104, %v15, 0
    %v185 = vsel %vm108, %v178, 0
    %187 = vmatprep.subr.mxu0 0.0
    %188 = vmatpush1.msra.mxu0 %v185
    %189 = vmatprep.subr.mxu0 0.0
    %190 = vmatpush1.msra.mxu0 0.0
    %191 = vmatprep.subr.mxu0 0.0
    %192 = vmatpush1.msra.mxu0 0.0
    %193 = vmatprep.subr.mxu0 0.0
    %194 = vmatpush1.msra.mxu0 0.0
    %195 = vmatprep.subr.mxu0 0.0
    %196 = vmatpush1.msra.mxu0 0.0
    %197 = vmatprep.subr.mxu0 0.0
    %198 = vmatpush1.msra.mxu0 0.0
    %199 = vmatprep.subr.mxu0 0.0
    %200 = vmatpush1.msra.mxu0 0.0
    %201 = vmatprep.subr.mxu0 0.0
    %202 = vmatpush1.msra.mxu0 0.0
    %203 = vmatprep.subr.mxu0 0.0
    %204 = vmatpush1.msra.mxu0 0.0
    %205 = vmatprep.subr.mxu0 0.0
    %206 = vmatpush1.msra.mxu0 0.0
    %207 = vmatprep.subr.mxu0 0.0
    %208 = vmatpush1.msra.mxu0 0.0
    %209 = vmatprep.subr.mxu0 0.0
    %210 = vmatpush1.msra.mxu0 0.0
    %211 = vmatprep.subr.mxu0 0.0
    %212 = vmatpush1.msra.mxu0 0.0
    %213 = vmatprep.subr.mxu0 0.0
    %214 = vmatpush1.msra.mxu0 0.0
    %215 = vmatprep.subr.mxu0 0.0
    %216 = vmatpush1.msra.mxu0 0.0
    %217 = vmatprep.subr.mxu0 0.0
    %218 = vmatpush1.msra.mxu0 0.0
    %219 = vmatprep.subr.mxu0 0.0
    %220 = vmatpush1.msra.mxu0 0.0
    %221 = vmatprep.subr.mxu0 0.0
    %222 = vmatpush1.msra.mxu0 0.0
    %223 = vmatprep.subr.mxu0 0.0
    %224 = vmatpush1.msra.mxu0 0.0
    %225 = vmatprep.subr.mxu0 0.0
    %226 = vmatpush1.msra.mxu0 0.0
    %227 = vmatprep.subr.mxu0 0.0
    %228 = vmatpush1.msra.mxu0 0.0
    %229 = vmatprep.subr.mxu0 0.0
    %230 = vmatpush1.msra.mxu0 0.0
    %231 = vmatprep.subr.mxu0 0.0
    %232 = vmatpush1.msra.mxu0 0.0
    %233 = vmatprep.subr.mxu0 0.0
    %234 = vmatpush1.msra.mxu0 0.0
    %235 = vmatprep.subr.mxu0 0.0
    %236 = vmatpush1.msra.mxu0 0.0
    %237 = vmatprep.subr.mxu0 0.0
    %238 = vmatpush1.msra.mxu0 0.0
    %239 = vmatprep.subr.mxu0 0.0
    %240 = vmatpush1.msra.mxu0 0.0
    %241 = vmatprep.subr.mxu0 0.0
    %242 = vmatpush1.msra.mxu0 0.0
    %243 = vmatprep.subr.mxu0 0.0
    %244 = vmatpush1.msra.mxu0 0.0
    %245 = vmatprep.subr.mxu0 0.0
    %246 = vmatpush1.msra.mxu0 0.0
    %247 = vmatprep.subr.mxu0 0.0
    %248 = vmatpush1.msra.mxu0 0.0
    %249 = vmatprep.subr.mxu0 0.0
    %250 = vmatpush1.msra.mxu0 0.0
    %251 = vmatprep.mubr.f32.mxu0 0.0
    %252 = vmatmul.mubr.f32.gmra.mrb[0].mxu0 %v182
    %v253 = vpop.f32.mrb[0].mxu0
    %v254 = vadd.f32 %v16, %v253
    %v255 = vpop.f32.mrb[0].mxu0
    %256 = vdwg.mxu0
    %257 = vst.msk [vmem:[#allocation2] sm:$0xff] %vm18, %v254
    %s258 = scalar_lea.vmem %s0, 4
    %v259 = vld [vmem:[%s258] sm:$0xf]
    %v261 = vsel %vm18, %v259, 0
    %263 = vmatprep.subr.mxu0 0.0
    %264 = vmatpush1.xpose.msra.mxu0 %v261
    %265 = vmatprep.subr.mxu0 0.0
    %266 = vmatpush1.xpose.msra.mxu0 0.0
    %267 = vmatprep.subr.mxu0 0.0
    %268 = vmatpush1.xpose.msra.mxu0 0.0
    %269 = vmatprep.subr.mxu0 0.0
    %270 = vmatpush1.xpose.msra.mxu0 0.0
    %271 = vmatprep.subr.mxu0 0.0
    %272 = vmatpush1.xpose.msra.mxu0 0.0
    %273 = vmatprep.subr.mxu0 0.0
    %274 = vmatpush1.xpose.msra.mxu0 0.0
    %275 = vmatprep.subr.mxu0 0.0
    %276 = vmatpush1.xpose.msra.mxu0 0.0
    %277 = vmatprep.subr.mxu0 0.0
    %278 = vmatpush1.xpose.msra.mxu0 0.0
    %279 = vmatprep.subr.mxu0 0.0
    %280 = vmatpush1.xpose.msra.mxu0 0.0
    %281 = vmatprep.subr.mxu0 0.0
    %282 = vmatpush1.xpose.msra.mxu0 0.0
    %283 = vmatprep.subr.mxu0 0.0
    %284 = vmatpush1.xpose.msra.mxu0 0.0
    %285 = vmatprep.subr.mxu0 0.0
    %286 = vmatpush1.xpose.msra.mxu0 0.0
    %287 = vmatprep.subr.mxu0 0.0
    %288 = vmatpush1.xpose.msra.mxu0 0.0
    %289 = vmatprep.subr.mxu0 0.0
    %290 = vmatpush1.xpose.msra.mxu0 0.0
    %291 = vmatprep.subr.mxu0 0.0
    %292 = vmatpush1.xpose.msra.mxu0 0.0
    %293 = vmatprep.subr.mxu0 0.0
    %294 = vmatpush1.xpose.msra.mxu0 0.0
    %295 = vmatprep.subr.mxu0 0.0
    %296 = vmatpush1.xpose.msra.mxu0 0.0
    %297 = vmatprep.subr.mxu0 0.0
    %298 = vmatpush1.xpose.msra.mxu0 0.0
    %299 = vmatprep.subr.mxu0 0.0
    %300 = vmatpush1.xpose.msra.mxu0 0.0
    %301 = vmatprep.subr.mxu0 0.0
    %302 = vmatpush1.xpose.msra.mxu0 0.0
    %303 = vmatprep.subr.mxu0 0.0
    %304 = vmatpush1.xpose.msra.mxu0 0.0
    %305 = vmatprep.subr.mxu0 0.0
    %306 = vmatpush1.xpose.msra.mxu0 0.0
    %307 = vmatprep.subr.mxu0 0.0
    %308 = vmatpush1.xpose.msra.mxu0 0.0
    %309 = vmatprep.subr.mxu0 0.0
    %310 = vmatpush1.xpose.msra.mxu0 0.0
    %311 = vmatprep.subr.mxu0 0.0
    %312 = vmatpush1.xpose.msra.mxu0 0.0
    %313 = vmatprep.subr.mxu0 0.0
    %314 = vmatpush1.xpose.msra.mxu0 0.0
    %315 = vmatprep.subr.mxu0 0.0
    %316 = vmatpush1.xpose.msra.mxu0 0.0
    %317 = vmatprep.subr.mxu0 0.0
    %318 = vmatpush1.xpose.msra.mxu0 0.0
    %319 = vmatprep.subr.mxu0 0.0
    %320 = vmatpush1.xpose.msra.mxu0 0.0
    %321 = vmatprep.subr.mxu0 0.0
    %322 = vmatpush1.xpose.msra.mxu0 0.0
    %323 = vmatprep.subr.mxu0 0.0
    %324 = vmatpush1.xpose.msra.mxu0 0.0
    %325 = vmatprep.subr.mxu0 0.0
    %326 = vmatpush1.xpose.msra.mxu0 0.0
    %327 = vmatprep.mubr.f32.mxu0 0.0
    %328 = vmatmul.mubr.f32.gmra.mrb[0].mxu0 %v261
    %v329 = vpop.f32.mrb[0].mxu0
    %v330 = vadd.f32 0.0, %v329
    %v331 = vpop.f32.mrb[0].mxu0
    %332 = vdwg.mxu0
    %v333 = vsel %vm92, %v330, -inf
    %334 = vmax.xlane.f32.xlu0 %v333
    %v335 = vpop.xlane.xlu0 %334
    %v336 = vsub.f32 %v330, %v335
    %v337 = vmul.f32 %v336, 1.442695
    %v338 = vpow.pop %v337
    %v339 = vsel %vm92, %v338, 0.0
    %340 = vadd.xlane.f32.xlu0 %v339
    %v341 = vpop.xlane.xlu0 %340
    %v342 = vrcp.pop %v341
    %v343 = vmul.f32 %v338, %v342
    %v345 = vsel %vm104, %v343, 0
    %v347 = vsel %vm108, %v259, 0
    %349 = vmatprep.subr.mxu0 0.0
    %350 = vmatpush1.msra.mxu0 %v347
    %351 = vmatprep.subr.mxu0 0.0
    %352 = vmatpush1.msra.mxu0 0.0
    %353 = vmatprep.subr.mxu0 0.0
    %354 = vmatpush1.msra.mxu0 0.0
    %355 = vmatprep.subr.mxu0 0.0
    %356 = vmatpush1.msra.mxu0 0.0
    %357 = vmatprep.subr.mxu0 0.0
    %358 = vmatpush1.msra.mxu0 0.0
    %359 = vmatprep.subr.mxu0 0.0
    %360 = vmatpush1.msra.mxu0 0.0
    %361 = vmatprep.subr.mxu0 0.0
    %362 = vmatpush1.msra.mxu0 0.0
    %363 = vmatprep.subr.mxu0 0.0
    %364 = vmatpush1.msra.mxu0 0.0
    %365 = vmatprep.subr.mxu0 0.0
    %366 = vmatpush1.msra.mxu0 0.0
    %367 = vmatprep.subr.mxu0 0.0
    %368 = vmatpush1.msra.mxu0 0.0
    %369 = vmatprep.subr.mxu0 0.0
    %370 = vmatpush1.msra.mxu0 0.0
    %371 = vmatprep.subr.mxu0 0.0
    %372 = vmatpush1.msra.mxu0 0.0
    %373 = vmatprep.subr.mxu0 0.0
    %374 = vmatpush1.msra.mxu0 0.0
    %375 = vmatprep.subr.mxu0 0.0
    %376 = vmatpush1.msra.mxu0 0.0
    %377 = vmatprep.subr.mxu0 0.0
    %378 = vmatpush1.msra.mxu0 0.0
    %379 = vmatprep.subr.mxu0 0.0
    %380 = vmatpush1.msra.mxu0 0.0
    %381 = vmatprep.subr.mxu0 0.0
    %382 = vmatpush1.msra.mxu0 0.0
    %383 = vmatprep.subr.mxu0 0.0
    %384 = vmatpush1.msra.mxu0 0.0
    %385 = vmatprep.subr.mxu0 0.0
    %386 = vmatpush1.msra.mxu0 0.0
    %387 = vmatprep.subr.mxu0 0.0
    %388 = vmatpush1.msra.mxu0 0.0
    %389 = vmatprep.subr.mxu0 0.0
    %390 = vmatpush1.msra.mxu0 0.0
    %391 = vmatprep.subr.mxu0 0.0
    %392 = vmatpush1.msra.mxu0 0.0
    %393 = vmatprep.subr.mxu0 0.0
    %394 = vmatpush1.msra.mxu0 0.0
    %395 = vmatprep.subr.mxu0 0.0
    %396 = vmatpush1.msra.mxu0 0.0
    %397 = vmatprep.subr.mxu0 0.0
    %398 = vmatpush1.msra.mxu0 0.0
    %399 = vmatprep.subr.mxu0 0.0
    %400 = vmatpush1.msra.mxu0 0.0
    %401 = vmatprep.subr.mxu0 0.0
    %402 = vmatpush1.msra.mxu0 0.0
    %403 = vmatprep.subr.mxu0 0.0
    %404 = vmatpush1.msra.mxu0 0.0
    %405 = vmatprep.subr.mxu0 0.0
    %406 = vmatpush1.msra.mxu0 0.0
    %407 = vmatprep.subr.mxu0 0.0
    %408 = vmatpush1.msra.mxu0 0.0
    %409 = vmatprep.subr.mxu0 0.0
    %410 = vmatpush1.msra.mxu0 0.0
    %411 = vmatprep.subr.mxu0 0.0
    %412 = vmatpush1.msra.mxu0 0.0
    %413 = vmatprep.mubr.f32.mxu0 0.0
    %414 = vmatmul.mubr.f32.gmra.mrb[0].mxu0 %v345
    %v415 = vpop.f32.mrb[0].mxu0
    %v416 = vadd.f32 0.0, %v415
    %v417 = vpop.f32.mrb[0].mxu0
    %418 = vdwg.mxu0
    %v420 = vsel %vm108, %v416, 0
    %422 = vmatprep.subr.mxu0 0.0
    %423 = vmatpush1.msra.mxu0 %v420
    %424 = vmatprep.subr.mxu0 0.0
    %425 = vmatpush1.msra.mxu0 0.0
    %426 = vmatprep.subr.mxu0 0.0
    %427 = vmatpush1.msra.mxu0 0.0
    %428 = vmatprep.subr.mxu0 0.0
    %429 = vmatpush1.msra.mxu0 0.0
    %430 = vmatprep.subr.mxu0 0.0
    %431 = vmatpush1.msra.mxu0 0.0
    %432 = vmatprep.subr.mxu0 0.0
    %433 = vmatpush1.msra.mxu0 0.0
    %434 = vmatprep.subr.mxu0 0.0
    %435 = vmatpush1.msra.mxu0 0.0
    %436 = vmatprep.subr.mxu0 0.0
    %437 = vmatpush1.msra.mxu0 0.0
    %438 = vmatprep.subr.mxu0 0.0
    %439 = vmatpush1.msra.mxu0 0.0
    %440 = vmatprep.subr.mxu0 0.0
    %441 = vmatpush1.msra.mxu0 0.0
    %442 = vmatprep.subr.mxu0 0.0
    %443 = vmatpush1.msra.mxu0 0.0
    %444 = vmatprep.subr.mxu0 0.0
    %445 = vmatpush1.msra.mxu0 0.0
    %446 = vmatprep.subr.mxu0 0.0
    %447 = vmatpush1.msra.mxu0 0.0
    %448 = vmatprep.subr.mxu0 0.0
    %449 = vmatpush1.msra.mxu0 0.0
    %450 = vmatprep.subr.mxu0 0.0
    %451 = vmatpush1.msra.mxu0 0.0
    %452 = vmatprep.subr.mxu0 0.0
    %453 = vmatpush1.msra.mxu0 0.0
    %454 = vmatprep.subr.mxu0 0.0
    %455 = vmatpush1.msra.mxu0 0.0
    %456 = vmatprep.subr.mxu0 0.0
    %457 = vmatpush1.msra.mxu0 0.0
    %458 = vmatprep.subr.mxu0 0.0
    %459 = vmatpush1.msra.mxu0 0.0
    %460 = vmatprep.subr.mxu0 0.0
    %461 = vmatpush1.msra.mxu0 0.0
    %462 = vmatprep.subr.mxu0 0.0
    %463 = vmatpush1.msra.mxu0 0.0
    %464 = vmatprep.subr.mxu0 0.0
    %465 = vmatpush1.msra.mxu0 0.0
    %466 = vmatprep.subr.mxu0 0.0
    %467 = vmatpush1.msra.mxu0 0.0
    %468 = vmatprep.subr.mxu0 0.0
    %469 = vmatpush1.msra.mxu0 0.0
    %470 = vmatprep.subr.mxu0 0.0
    %471 = vmatpush1.msra.mxu0 0.0
    %472 = vmatprep.subr.mxu0 0.0
    %473 = vmatpush1.msra.mxu0 0.0
    %474 = vmatprep.subr.mxu0 0.0
    %475 = vmatpush1.msra.mxu0 0.0
    %476 = vmatprep.subr.mxu0 0.0
    %477 = vmatpush1.msra.mxu0 0.0
    %478 = vmatprep.subr.mxu0 0.0
    %479 = vmatpush1.msra.mxu0 0.0
    %480 = vmatprep.subr.mxu0 0.0
    %481 = vmatpush1.msra.mxu0 0.0
    %482 = vmatprep.subr.mxu0 0.0
    %483 = vmatpush1.msra.mxu0 0.0
    %484 = vmatprep.subr.mxu0 0.0
    %485 = vmatpush1.msra.mxu0 0.0
    %486 = vmatprep.mubr.f32.mxu0 0.0
    %487 = vmatmul.mubr.f32.gmra.mrb[0].mxu0 %v182
    %v488 = vpop.f32.mrb[0].mxu0
    %v489 = vadd.f32 %v16, %v488
    %v490 = vpop.f32.mrb[0].mxu0
    %491 = vdwg.mxu0
    %s492 = scalar_lea.vmem [#allocation2], 8
    %493 = vst.msk [vmem:[%s492] sm:$0xff] %vm18, %v489
    // Predicated region
    $region14: #{tpu_custom_call.1} parent=1 // pred_check
      _
    $region15: #{tpu_custom_call.1} parent=1 // pred_check_branch
      %495 = sbr.rel (0) target = $region17
    $region16: #{tpu_custom_call.1} parent=1 // pred_region
      %s497 = ssub.s32 256, 256
      %498 = vsyncadd [#allocation3], %s497
      %s499 = sshll.u32 [#allocation2], 4
      %s500 = int_to_ptr.vmem [resolvable:$true] %s499
      %505 = dma.vmem_to_hbm [thread:$0]  %s500, 256, %s3, [#allocation3], 128, 128, 8
    $region17: #{tpu_custom_call.1} parent=1 // pred_fallthru
      _
    // Predicated region
    $region18: #{tpu_custom_call.1} parent=1 // pred_check
      _
    $region19: #{tpu_custom_call.1} parent=1 // pred_check_branch
      %507 = sbr.rel (0) target = $region21
    $region20: #{tpu_custom_call.1} parent=1 // pred_region
      %508 = dma.done [#allocation3], 256
    $region21: #{tpu_custom_call.1} parent=1 // pred_fallthru
      _
    %509 = vsyncpa [#allocation3], 1

</llo_original>
